<compile_context>
chip_gen: v6e
topology: v6e:2x2x1
jax: 0.10.0
libtpu: 0.0.40
codegen_flags: <defaults>
</compile_context>

<pallas_src>
import jax
import jax.numpy as jnp
from jax.experimental import pallas as pl
from jax.experimental.pallas import tpu as pltpu


def _round_up(x, m):
    return ((x + m - 1) // m) * m


def _make_logreg_kernel(F, TB, TF, nk):
    """Builds the kernel with static shape/masking decisions baked in."""
    if TF >= 128:
        chunks = [(c * 128, 128) for c in range(TF // 128)]
    else:  # tiny feature dim: single full-width block (TF == F)
        chunks = [(0, TF)]

    def _needs_mask(start, width):
        # Does this 128-lane chunk overrun the real feature dim when processing
        # the LAST feature block?  (Static decision; only those chunks pay for
        # the iota/compare/select.)
        return (nk - 1) * TF + start + width > F

    any_mask = any(_needs_mask(s, w) for s, w in chunks)

    def kernel(x_ref, w_ref, b_ref, o_ref, acc_ref):
        # x_ref: (TB, TF) VMEM tile of x
        # w_ref: (1, TF) VMEM lane-dense weight row (zero-padded tail)
        # b_ref: (1, 1) SMEM scalar bias
        # o_ref: (TB, 1) output block (written only on the last k step)
        # acc_ref: (TB, 128) f32 lane-dense accumulator, resident across k
        k = pl.program_id(1)

        @pl.when(k == 0)
        def _init():
            acc_ref[...] = jnp.zeros_like(acc_ref)

        # Number of valid feature columns in this block (>= TF for non-tail blocks).
        limit = F - k * TF
        if any_mask:
            lane = jax.lax.broadcasted_iota(jnp.int32, (TB, 128), 1)

        # VPU multiply-accumulate, 128 lanes at a time. No MXU involved.
        for start, width in chunks:
            xc = x_ref[:, start:start + width]
            wc = w_ref[:, start:start + width]          # (1, width) sublane-broadcast
            if _needs_mask(start, width):
                # Zero out garbage columns of the (unpadded) x tail block.
                xc = jnp.where(lane[:, :width] < (limit - start), xc, 0.0)
            if width == 128:
                acc_ref[...] += xc * wc
            else:
                acc_ref[:, :width] += xc * wc

        @pl.when(k == pl.num_programs(1) - 1)
        def _finalize():
            # Single cross-lane reduction + bias + sigmoid.
            z = acc_ref[...].sum(axis=-1, keepdims=True) + b_ref[0, 0]
            o_ref[...] = jax.nn.sigmoid(z).astype(o_ref.dtype)

    return kernel


def log_regression(x, w, b, *, tb_max=1024, tf_max=2048):
    """sigmoid(x @ w.T + b); x: (B, F) f32, w: (1, F), b: (1,) -> (B, 1) f32."""
    x = jnp.asarray(x, jnp.float32)
    B, F = x.shape
    assert tb_max % 8 == 0 and tf_max % 128 == 0

    # ---- batch tile: multiple of 8, never larger than B, and aim for >= 2
    # ---- blocks so the "parallel" axis spans both TensorCores on v7x.
    if B < 8:
        TB = B                                           # block == full dim
    else:
        TB = min(tb_max, _round_up(pl.cdiv(B, 2), 8))    # <= B by construction
    nb = pl.cdiv(B, TB)

    # ---- feature tile: multiple of 128 and <= F (tail block handled in-kernel),
    # ---- or the full (tiny) feature dim if F < 128.
    if F < 128:
        TF = F                                           # block == full dim
    else:
        TF = min(tf_max, (F // 128) * 128)
    nk = pl.cdiv(F, TF)

    # ---- only the tiny weight gets zero-padded; x is never copied/padded.
    F_pad = nk * TF
    w_row = jnp.asarray(w, jnp.float32).reshape(1, F)     # lane-dense weight row
    if F_pad != F:
        w_row = jnp.pad(w_row, ((0, 0), (0, F_pad - F)))
    b2 = jnp.asarray(b, jnp.float32).reshape(1, 1)

    kernel = _make_logreg_kernel(F, TB, TF, nk)

    out = pl.pallas_call(
        kernel,
        out_shape=jax.ShapeDtypeStruct((B, 1), jnp.float32),
        grid_spec=pltpu.PrefetchScalarGridSpec(
            num_scalar_prefetch=0,
            grid=(nb, nk),                                        # reduction axis last
            in_specs=[
                pl.BlockSpec((TB, TF), lambda i, k: (i, k)),      # x tile
                pl.BlockSpec((1, TF), lambda i, k: (0, k)),       # weight row (lane-dense)
                pl.BlockSpec(memory_space=pltpu.MemorySpace.SMEM),  # bias scalar
            ],
            out_specs=pl.BlockSpec((TB, 1), lambda i, k: (i, 0)),
            scratch_shapes=[pltpu.VMEM((TB, 128), jnp.float32)],  # lane-dense accumulator
        ),
        compiler_params=pltpu.CompilerParams(
            dimension_semantics=("parallel", "arbitrary"),
            vmem_limit_bytes=48 * 1024 * 1024,   # ~18 MiB used at default tiles; safe on v5e/v6e/v7x
        ),
    )(x, w_row, b2)

    return out


if __name__ == "__main__":
    key = jax.random.PRNGKey(0)
    k_x, k_w, k_b = jax.random.split(key, 3)

    batch = 300            # not a multiple of the batch tile -> partial batch block
    input_features = 200   # not a multiple of 128 -> in-kernel feature-tail masking

    # nn.Linear-style init: U(-1/sqrt(fan_in), 1/sqrt(fan_in))
    bound = 1.0 / jnp.sqrt(jnp.float32(input_features))
    w = jax.random.uniform(k_w, (1, input_features), jnp.float32, -bound, bound)
    b = jax.random.uniform(k_b, (1,), jnp.float32, -bound, bound)
    x = jax.random.normal(k_x, (batch, input_features), jnp.float32)

    # Default tiles -> grid (2 batch blocks x 2 feature blocks); exercises both
    # the partial batch block and the masked feature-tail path.
    out = log_regression(x, w, b)
    out = jax.block_until_ready(out)

    ref = jax.nn.sigmoid(x @ w.T + b)
    assert out.shape == (batch, 1)
    assert jnp.allclose(out, ref, atol=1e-5, rtol=1e-5)
    assert bool(jnp.all(jnp.isfinite(out)))

    print("KERNEL_OK")
</pallas_src>

<mosaic_0001>
module attributes {stable_mosaic.version = 11 : i64} {
  func.func @kernel(%arg0: i32, %arg1: i32, %arg2: memref<152x128xf32, #tpu.memory_space<vmem>>, %arg3: memref<1x128xf32, #tpu.memory_space<vmem>>, %arg4: memref<1x1xf32, #tpu.memory_space<smem>>, %arg5: memref<152x1xf32, #tpu.memory_space<vmem>>, %arg6: memref<152x128xf32, #tpu.memory_space<vmem>>) attributes {dimension_semantics = [#tpu.dimension_semantics<parallel>, #tpu.dimension_semantics<arbitrary>], iteration_bounds = array<i64: 2, 2>, scalar_prefetch = 0 : i64, scratch_operands = 1 : i64, tpu.core_type = #tpu.core_type<tc>, window_params = [{transform_indices = @transform_0, window_bounds = array<i64: 152, 128>}, {transform_indices = @transform_1, window_bounds = array<i64: 1, 128>}, {transform_indices = @transform_2, window_bounds = array<i64: 1, 1>}, {transform_indices = @transform_3, window_bounds = array<i64: 152, 1>}]} {
    %c0_i32 = arith.constant 0 : i32
    %0 = arith.cmpi eq, %arg1, %c0_i32 : i32
    %1 = arith.extui %0 : i1 to i32
    %c0_i32_0 = arith.constant 0 : i32
    %2 = arith.cmpi ne, %1, %c0_i32_0 : i32
    scf.if %2 {
      %cst_10 = arith.constant 0.000000e+00 : f32
      %21 = vector.broadcast %cst_10 : f32 to vector<152x128xf32>
      %c0_11 = arith.constant 0 : index
      %c0_12 = arith.constant 0 : index
      %22 = vector.load %arg6[%c0_11, %c0_12] : memref<152x128xf32, #tpu.memory_space<vmem>>, vector<152x128xf32>
      tpu.vector_store %arg6[%c0_11, %c0_12], %21 {strides = array<i32>} : memref<152x128xf32, #tpu.memory_space<vmem>>, vector<152x128xf32>,
    } else {
    }
    %c128_i32 = arith.constant 128 : i32
    %3 = arith.muli %arg1, %c128_i32 : i32
    %c200_i32 = arith.constant 200 : i32
    %4 = arith.subi %c200_i32, %3 : i32
    %5 = tpu.iota {dimensions = array<i32: 1>} : vector<152x128xi32>
    %c0 = arith.constant 0 : index
    %c0_1 = arith.constant 0 : index
    %6 = vector.load %arg2[%c0, %c0_1] : memref<152x128xf32, #tpu.memory_space<vmem>>, vector<152x128xf32>
    %c0_2 = arith.constant 0 : index
    %c0_3 = arith.constant 0 : index
    %7 = vector.load %arg3[%c0_2, %c0_3] : memref<1x128xf32, #tpu.memory_space<vmem>>, vector<1x128xf32>
    %c0_i32_4 = arith.constant 0 : i32
    %8 = arith.subi %4, %c0_i32_4 : i32
    %9 = vector.broadcast %8 : i32 to vector<152x128xi32>
    %10 = arith.cmpi slt, %5, %9 : vector<152x128xi32>
    %cst = arith.constant 0.000000e+00 : f32
    %11 = vector.broadcast %cst : f32 to vector<152x128xf32>
    %12 = arith.select %10, %6, %11 : vector<152x128xi1>, vector<152x128xf32>
    %c0_5 = arith.constant 0 : index
    %c0_6 = arith.constant 0 : index
    %13 = vector.load %arg6[%c0_5, %c0_6] : memref<152x128xf32, #tpu.memory_space<vmem>>, vector<152x128xf32>
    %14 = vector.broadcast %7 : vector<1x128xf32> to vector<152x128xf32>
    %15 = arith.mulf %12, %14 : vector<152x128xf32>
    %16 = arith.addf %13, %15 : vector<152x128xf32>
    %c0_7 = arith.constant 0 : index
    %c0_8 = arith.constant 0 : index
    %17 = vector.load %arg6[%c0_7, %c0_8] : memref<152x128xf32, #tpu.memory_space<vmem>>, vector<152x128xf32>
    tpu.vector_store %arg6[%c0_7, %c0_8], %16 {strides = array<i32>} : memref<152x128xf32, #tpu.memory_space<vmem>>, vector<152x128xf32>,
    %c1_i32 = arith.constant 1 : i32
    %18 = arith.cmpi eq, %arg1, %c1_i32 : i32
    %19 = arith.extui %18 : i1 to i32
    %c0_i32_9 = arith.constant 0 : i32
    %20 = arith.cmpi ne, %19, %c0_i32_9 : i32
    scf.if %20 {
      %c0_10 = arith.constant 0 : index
      %c0_11 = arith.constant 0 : index
      %21 = vector.load %arg6[%c0_10, %c0_11] : memref<152x128xf32, #tpu.memory_space<vmem>>, vector<152x128xf32>
      %cst_12 = arith.constant dense<0.000000e+00> : vector<152xf32>
      %22 = vector.multi_reduction <add>, %21, %cst_12 [1] : vector<152x128xf32> to vector<152xf32>
      %23 = vector.shape_cast %22 : vector<152xf32> to vector<152x1xf32>
      %c0_13 = arith.constant 0 : index
      %c0_14 = arith.constant 0 : index
      %24 = memref.load %arg4[%c0_13, %c0_14] : memref<1x1xf32, #tpu.memory_space<smem>>
      %25 = vector.broadcast %24 : f32 to vector<152x1xf32>
      %26 = arith.addf %23, %25 : vector<152x1xf32>
      %27 = arith.negf %26 : vector<152x1xf32>
      %28 = math.exp %27 : vector<152x1xf32>
      %cst_15 = arith.constant 1.000000e+00 : f32
      %29 = vector.broadcast %cst_15 : f32 to vector<152x1xf32>
      %30 = arith.addf %29, %28 : vector<152x1xf32>
      %31 = arith.divf %29, %30 : vector<152x1xf32>
      %c0_16 = arith.constant 0 : index
      %c0_17 = arith.constant 0 : index
      %32 = vector.load %arg5[%c0_16, %c0_17] : memref<152x1xf32, #tpu.memory_space<vmem>>, vector<152x1xf32>
      tpu.vector_store %arg5[%c0_16, %c0_17], %31 {strides = array<i32>} : memref<152x1xf32, #tpu.memory_space<vmem>>, vector<152x1xf32>,
    } else {
    }
    return
  }
  func.func @transform_0(%arg0: i32, %arg1: i32) -> (i32, i32) {
    %c0_i32 = arith.constant 0 : i32
    return %arg0, %arg1 : i32, i32
  }
  func.func @transform_1(%arg0: i32, %arg1: i32) -> (i32, i32) {
    %c0_i32 = arith.constant 0 : i32
    %c0_i32_0 = arith.constant 0 : i32
    return %c0_i32, %arg1 : i32, i32
  }
  func.func @transform_2(%arg0: i32, %arg1: i32) -> (i32, i32) {
    %c0_i32 = arith.constant 0 : i32
    %c0_i32_0 = arith.constant 0 : i32
    %c0_i32_1 = arith.constant 0 : i32
    return %c0_i32, %c0_i32_0 : i32, i32
  }
  func.func @transform_3(%arg0: i32, %arg1: i32) -> (i32, i32) {
    %c0_i32 = arith.constant 0 : i32
    %c0_i32_0 = arith.constant 0 : i32
    return %arg0, %c0_i32 : i32, i32
  }
}

</mosaic_0001>

<llo_original>
// kernel: tpu_custom_call.1
$region0: #{tpu_custom_call.1}
  #allocation0 [shape = 'u32[]', space=smem, size = 0x4, offset = 0x4, fixed_abs, tag = 'smem constant byte address 0x4 - core index']
  #allocation1 [shape = 'u32[144,128]{1,0:T(1,128)}', space=vmem, size = 0x12000, scoped, tag = 'internal scratch']
  #allocation2 [shape = 'f32[152,128]{1,0:T(8,128)}', space=vmem, size = 0x13000, scoped, tag = 'scratch operand']
  #allocation3 [shape = 'f32[1,1]{1,0:T(1,128)S(6)}', space=smem, size = 0x200, scoped, tag = 'scoped memory for tpu_custom_call.1']
  %s0 = inlined_call_operand.vmem [shape: f32[300,200], index: 0, kind: input, shape index: {}]
  %s1 = inlined_call_operand.vmem [shape: f32[1,256], index: 1, kind: input, shape index: {}]
  %s2 = inlined_call_operand.<no memory space> [shape: f32[1,1], index: 2, kind: input, shape index: {}]
  %s3 = inlined_call_operand.vmem [shape: f32[300,1], index: 3, kind: output, shape index: {}]
  %s4 = sld [smem:[#allocation0]]
  $region91: #{tpu_custom_call.1} parent=0
    _
  %s6 = ssub.s32 1, %s4
  %s7 = scalar_select 0, %s6, %s4
  %8 = sst [smem:[#allocation3]] %s2
  $region1: #{tpu_custom_call.1} parent=0
    #allocation4 [shape = 'u8[155648]{0}', space=vmem, size = 0x26000, scoped, tag = 'input window, operand 0']
    loop: start=0, step=1, limit=6
    $region2: #{tpu_custom_call.1} parent=1 // loop_pre_header
      _
    $region3: #{tpu_custom_call.1} parent=1 // loop_header
      %s10 = sphi 0, %s14
      %p11 = scmp.ge.s32.totalorder %s10, 6
      %s17 = sphi 0, %s29
      %s18 = sphi 0, %s25
      %s19 = sphi 0, %s17
      %s20 = sphi 0, %s18
      %s21 = sphi 0, %s19
      %s22 = sphi 0, %s20
      %s34 = sphi 0, %s36
      %s37 = sphi 0, %s34
      %s38 = sphi 0, %s37
      %s54 = sphi 0, %s38
      %s60 = sphi 0, %s62
      %s63 = sphi 0, %s60
      %s64 = sphi 0, %s63
      %s80 = sphi 0, %s64
      %s84 = sphi 0, %s84
      %s86 = sphi 0, %s84
      %s87 = sphi 0, %s86
      %s101 = sphi 0, %s87
      %s107 = sphi 0, %s109
      %s110 = sphi 0, %s107
      %s111 = sphi 0, %s110
      %s127 = sphi 0, %s111
    $region4: #{tpu_custom_call.1} parent=1 // loop_header_branch
      %13 = sbr.rel (%p11) target = $region8
    $region5: #{tpu_custom_call.1} parent=1 // loop_body
      %s15 = ssub.s32 %s10, 1
      %s16 = ssub.s32 %s10, 2
      %s23 = sadd.s32 1, %s18
      %p24 = scmp.ge.s32.totalorder %s23, 2
      %s25 = scalar_select %p24, 0, %s23
      %s26 = sadd.s32 1, %s17
      %s27 = scalar_select %p24, %s26, %s17
      %p28 = scmp.ge.s32.totalorder %s27, 2
      %s29 = scalar_select %p28, 0, %s27
      %s30 = ssub.s32 %s17, %s29
      %s31 = ssub.s32 %s18, %s25
      %s32 = sor.u32 %s30, %s31
      %p33 = scmp.eq.s32.totalorder %s32, 0
      %s35 = sadd.s32 %s34, 1
      %s36 = scalar_select %p33, %s34, %s35
      %p39 = pneg %p33
      %p40 = scmp.eq.s32.totalorder %s10, 3
      %p41 = por %p39, %p40
      %p42 = scmp.ne.s32.totalorder %s34, %s37
      %p43 = scmp.eq.s32.totalorder %s10, 0
      %p44 = por %p42, %p43
      %p45 = scmp.ne.s32.totalorder %s34, %s37
      %p46 = scmp.eq.s32.totalorder %s15, 3
      %p47 = por %p45, %p46
      %p48 = scmp.ne.s32.totalorder %s37, %s38
      %p49 = scmp.eq.s32.totalorder %s15, 0
      %p50 = por %p48, %p49
      %p51 = scmp.ne.s32.totalorder %s37, %s38
      %p52 = scmp.eq.s32.totalorder %s16, 3
      %p53 = por %p51, %p52
      %p55 = scmp.ne.s32.totalorder %s38, %s54
      %p56 = scmp.eq.s32.totalorder %s16, 0
      %p57 = por %p55, %p56
      %s58 = ssub.s32 %s18, %s25
      %p59 = scmp.eq.s32.totalorder %s58, 0
      %s61 = sadd.s32 %s60, 1
      %s62 = scalar_select %p59, %s60, %s61
      %p65 = pneg %p59
      %p66 = scmp.eq.s32.totalorder %s10, 3
      %p67 = por %p65, %p66
      %p68 = scmp.ne.s32.totalorder %s60, %s63
      %p69 = scmp.eq.s32.totalorder %s10, 0
      %p70 = por %p68, %p69
      %p71 = scmp.ne.s32.totalorder %s60, %s63
      %p72 = scmp.eq.s32.totalorder %s15, 3
      %p73 = por %p71, %p72
      %p74 = scmp.ne.s32.totalorder %s63, %s64
      %p75 = scmp.eq.s32.totalorder %s15, 0
      %p76 = por %p74, %p75
      %p77 = scmp.ne.s32.totalorder %s63, %s64
      %p78 = scmp.eq.s32.totalorder %s16, 3
      %p79 = por %p77, %p78
      %p81 = scmp.ne.s32.totalorder %s64, %s80
      %p82 = scmp.eq.s32.totalorder %s16, 0
      %p83 = por %p81, %p82
      %s85 = sadd.s32 %s84, 1
      %p88 = scmp.eq.s32.totalorder %s10, 3
      %p89 = scmp.ne.s32.totalorder %s84, %s86
      %p90 = scmp.eq.s32.totalorder %s10, 0
      %p91 = por %p89, %p90
      %p92 = scmp.ne.s32.totalorder %s84, %s86
      %p93 = scmp.eq.s32.totalorder %s15, 3
      %p94 = por %p92, %p93
      %p95 = scmp.ne.s32.totalorder %s86, %s87
      %p96 = scmp.eq.s32.totalorder %s15, 0
      %p97 = por %p95, %p96
      %p98 = scmp.ne.s32.totalorder %s86, %s87
      %p99 = scmp.eq.s32.totalorder %s16, 3
      %p100 = por %p98, %p99
      %p102 = scmp.ne.s32.totalorder %s87, %s101
      %p103 = scmp.eq.s32.totalorder %s16, 0
      %p104 = por %p102, %p103
      %s105 = ssub.s32 %s17, %s29
      %p106 = scmp.eq.s32.totalorder %s105, 0
      %s108 = sadd.s32 %s107, 1
      %s109 = scalar_select %p106, %s107, %s108
      %p112 = pneg %p106
      %p113 = scmp.eq.s32.totalorder %s10, 3
      %p114 = por %p112, %p113
      %p115 = scmp.ne.s32.totalorder %s107, %s110
      %p116 = scmp.eq.s32.totalorder %s10, 0
      %p117 = por %p115, %p116
      %p118 = scmp.ne.s32.totalorder %s107, %s110
      %p119 = scmp.eq.s32.totalorder %s15, 3
      %p120 = por %p118, %p119
      %p121 = scmp.ne.s32.totalorder %s110, %s111
      %p122 = scmp.eq.s32.totalorder %s15, 0
      %p123 = por %p121, %p122
      %p124 = scmp.ne.s32.totalorder %s110, %s111
      %p125 = scmp.eq.s32.totalorder %s16, 3
      %p126 = por %p124, %p125
      %p128 = scmp.ne.s32.totalorder %s111, %s127
      %p129 = scmp.eq.s32.totalorder %s16, 0
      %p130 = por %p128, %p129
      %p131 = scmp.le.s32.totalorder 1, %s10
      %p132 = scmp.lt.s32.totalorder %s10, 5
      %p133 = pnand %p131, %p132
      %p134 = pneg %p133
      // Predicated region
      $region9: #{tpu_custom_call.1} parent=5 // pred_check
        _
      $region10: #{tpu_custom_call.1} parent=5 // pred_check_branch
        %136 = sbr.rel (%p133) target = $region12
      $region11: #{tpu_custom_call.1} parent=5 // pred_region
        %s137 = ssub.s32 %s10, 1
        // Predicated region
        $region13: #{tpu_custom_call.1} parent=11 // pred_check
          %p138 = pneg %p97
        $region14: #{tpu_custom_call.1} parent=11 // pred_check_branch
          %140 = sbr.rel (%p138) target = $region16
        $region15: #{tpu_custom_call.1} parent=11 // pred_region
          _
        $region16: #{tpu_custom_call.1} parent=11 // pred_fallthru
          _
      $region12: #{tpu_custom_call.1} parent=5 // pred_fallthru
        _
      %p141 = scmp.lt.s32.totalorder %s10, 4
      // Predicated region
      $region17: #{tpu_custom_call.1} parent=5 // pred_check
        %p142 = pneg %p141
      $region18: #{tpu_custom_call.1} parent=5 // pred_check_branch
        %144 = sbr.rel (%p142) target = $region20
      $region19: #{tpu_custom_call.1} parent=5 // pred_region
        // Predicated region
        $region21: #{tpu_custom_call.1} parent=19 // pred_check
          %p145 = pneg %p44
        $region22: #{tpu_custom_call.1} parent=19 // pred_check_branch
          %147 = sbr.rel (%p145) target = $region24
        $region23: #{tpu_custom_call.1} parent=19 // pred_region
          %s148 = sand.u32 %s34, 1
          %s149 = sand.u32 %s34, 1
          %s150 = smul.addr %s149, 152
          %s151 = scalar_lea.vmem [#allocation4], %s150
          %s152 = smul.u32 19, %s17
          %s153 = smul.addr %s152, 2
          %s154 = sadd.s32 %s18, %s153
          %s155 = smul.addr %s154, 8
          %s156 = scalar_lea.vmem %s0, %s155
          // Predicated region
          $region25: #{tpu_custom_call.1} parent=23 // pred_check
            _
          $region26: #{tpu_custom_call.1} parent=23 // pred_check_branch
            %158 = sbr.rel (0) target = $region28
          $region27: #{tpu_custom_call.1} parent=23 // pred_region
            // Predicated region
            $region29: #{tpu_custom_call.1} parent=27 // pred_check
              _
            $region30: #{tpu_custom_call.1} parent=27 // pred_check_branch
              %160 = sbr.rel (0) target = $region32
            $region31: #{tpu_custom_call.1} parent=27 // pred_region
              // Predicated region
              $region44: #{tpu_custom_call.1} parent=31 // pred_check
                _
              $region45: #{tpu_custom_call.1} parent=31 // pred_check_branch
                %212 = sbr.rel (0) target = $region47
              $region46: #{tpu_custom_call.1} parent=31 // pred_region
                loop: start=0, step=1, limit=1
                $region48: #{tpu_custom_call.1} parent=46 // loop_pre_header
                  _
                $region49: #{tpu_custom_call.1} parent=46 // loop_header
                  %s214 = sphi 0, %s218
                  %p215 = scmp.ge.s32.totalorder %s214, 1
                  %s219 = sphi %s156, %s156
                  %s220 = sphi %s151, %s151
                $region50: #{tpu_custom_call.1} parent=46 // loop_header_branch
                  %217 = sbr.rel (%p215) target = $region54
                $region51: #{tpu_custom_call.1} parent=46 // loop_body
                  %v221 = vld [vmem:[%s219] sm:$0xff]
                  %222 = vst [vmem:[%s220] sm:$0xff] %v221
                  %v223 = vld [vmem:[%s219 + $0x10] sm:$0xff]
                  %224 = vst [vmem:[%s220 + $0x8] sm:$0xff] %v223
                  %v225 = vld [vmem:[%s219 + $0x20] sm:$0xff]
                  %226 = vst [vmem:[%s220 + $0x10] sm:$0xff] %v225
                  %v227 = vld [vmem:[%s219 + $0x30] sm:$0xff]
                  %228 = vst [vmem:[%s220 + $0x18] sm:$0xff] %v227
                  %v229 = vld [vmem:[%s219 + $0x40] sm:$0xff]
                  %230 = vst [vmem:[%s220 + $0x20] sm:$0xff] %v229
                  %v231 = vld [vmem:[%s219 + $0x50] sm:$0xff]
                  %232 = vst [vmem:[%s220 + $0x28] sm:$0xff] %v231
                  %v233 = vld [vmem:[%s219 + $0x60] sm:$0xff]
                  %234 = vst [vmem:[%s220 + $0x30] sm:$0xff] %v233
                  %v235 = vld [vmem:[%s219 + $0x70] sm:$0xff]
                  %236 = vst [vmem:[%s220 + $0x38] sm:$0xff] %v235
                  %v237 = vld [vmem:[%s219 + $0x80] sm:$0xff]
                  %238 = vst [vmem:[%s220 + $0x40] sm:$0xff] %v237
                  %v239 = vld [vmem:[%s219 + $0x90] sm:$0xff]
                  %240 = vst [vmem:[%s220 + $0x48] sm:$0xff] %v239
                  %v241 = vld [vmem:[%s219 + $0xa0] sm:$0xff]
                  %242 = vst [vmem:[%s220 + $0x50] sm:$0xff] %v241
                  %v243 = vld [vmem:[%s219 + $0xb0] sm:$0xff]
                  %244 = vst [vmem:[%s220 + $0x58] sm:$0xff] %v243
                  %v245 = vld [vmem:[%s219 + $0xc0] sm:$0xff]
                  %246 = vst [vmem:[%s220 + $0x60] sm:$0xff] %v245
                  %v247 = vld [vmem:[%s219 + $0xd0] sm:$0xff]
                  %248 = vst [vmem:[%s220 + $0x68] sm:$0xff] %v247
                  %v249 = vld [vmem:[%s219 + $0xe0] sm:$0xff]
                  %250 = vst [vmem:[%s220 + $0x70] sm:$0xff] %v249
                  %v251 = vld [vmem:[%s219 + $0xf0] sm:$0xff]
                  %252 = vst [vmem:[%s220 + $0x78] sm:$0xff] %v251
                  %v253 = vld [vmem:[%s219 + $0x100] sm:$0xff]
                  %254 = vst [vmem:[%s220 + $0x80] sm:$0xff] %v253
                  %v255 = vld [vmem:[%s219 + $0x110] sm:$0xff]
                  %256 = vst [vmem:[%s220 + $0x88] sm:$0xff] %v255
                  %v257 = vld [vmem:[%s219 + $0x120] sm:$0xff]
                  %258 = vst [vmem:[%s220 + $0x90] sm:$0xff] %v257
                $region52: #{tpu_custom_call.1} parent=46 // loop_footer
                  %s218 = sadd.s32 1, %s214
                $region53: #{tpu_custom_call.1} parent=46 // loop_footer_branch
                  %213 = sbr.rel target = $region49
                $region54: #{tpu_custom_call.1} parent=46 // loop_exit
                  _
              $region47: #{tpu_custom_call.1} parent=31 // pred_fallthru
                _
              // Predicated region
              $region55: #{tpu_custom_call.1} parent=31 // pred_check
                _
              $region56: #{tpu_custom_call.1} parent=31 // pred_check_branch
                %260 = sbr.rel target = $region58
              $region57: #{tpu_custom_call.1} parent=31 // pred_region
                _
              $region58: #{tpu_custom_call.1} parent=31 // pred_fallthru
                _
            $region32: #{tpu_custom_call.1} parent=27 // pred_fallthru
              _
            // Predicated region
            $region33: #{tpu_custom_call.1} parent=27 // pred_check
              _
            $region34: #{tpu_custom_call.1} parent=27 // pred_check_branch
              %162 = sbr.rel target = $region36
            $region35: #{tpu_custom_call.1} parent=27 // pred_region
              %s164 = ssub.s32 256, 1
              loop: start=0, step=1, limit=1
              $region37: #{tpu_custom_call.1} parent=35 // loop_pre_header
                _
              $region38: #{tpu_custom_call.1} parent=35 // loop_header
                %s166 = sphi 0, %s170
                %p167 = scmp.ge.s32.totalorder %s166, 1
                %s171 = sphi %s156, %s156
                %s172 = sphi %s151, %s151
              $region39: #{tpu_custom_call.1} parent=35 // loop_header_branch
                %169 = sbr.rel (%p167) target = $region43
              $region40: #{tpu_custom_call.1} parent=35 // loop_body
                %v173 = vld [vmem:[%s171] sm:%s164]
                %174 = vst [vmem:[%s172] sm:%s164] %v173
                %v175 = vld [vmem:[%s171 + $0x10] sm:%s164]
                %176 = vst [vmem:[%s172 + $0x8] sm:%s164] %v175
                %v177 = vld [vmem:[%s171 + $0x20] sm:%s164]
                %178 = vst [vmem:[%s172 + $0x10] sm:%s164] %v177
                %v179 = vld [vmem:[%s171 + $0x30] sm:%s164]
                %180 = vst [vmem:[%s172 + $0x18] sm:%s164] %v179
                %v181 = vld [vmem:[%s171 + $0x40] sm:%s164]
                %182 = vst [vmem:[%s172 + $0x20] sm:%s164] %v181
                %v183 = vld [vmem:[%s171 + $0x50] sm:%s164]
                %184 = vst [vmem:[%s172 + $0x28] sm:%s164] %v183
                %v185 = vld [vmem:[%s171 + $0x60] sm:%s164]
                %186 = vst [vmem:[%s172 + $0x30] sm:%s164] %v185
                %v187 = vld [vmem:[%s171 + $0x70] sm:%s164]
                %188 = vst [vmem:[%s172 + $0x38] sm:%s164] %v187
                %v189 = vld [vmem:[%s171 + $0x80] sm:%s164]
                %190 = vst [vmem:[%s172 + $0x40] sm:%s164] %v189
                %v191 = vld [vmem:[%s171 + $0x90] sm:%s164]
                %192 = vst [vmem:[%s172 + $0x48] sm:%s164] %v191
                %v193 = vld [vmem:[%s171 + $0xa0] sm:%s164]
                %194 = vst [vmem:[%s172 + $0x50] sm:%s164] %v193
                %v195 = vld [vmem:[%s171 + $0xb0] sm:%s164]
                %196 = vst [vmem:[%s172 + $0x58] sm:%s164] %v195
                %v197 = vld [vmem:[%s171 + $0xc0] sm:%s164]
                %198 = vst [vmem:[%s172 + $0x60] sm:%s164] %v197
                %v199 = vld [vmem:[%s171 + $0xd0] sm:%s164]
                %200 = vst [vmem:[%s172 + $0x68] sm:%s164] %v199
                %v201 = vld [vmem:[%s171 + $0xe0] sm:%s164]
                %202 = vst [vmem:[%s172 + $0x70] sm:%s164] %v201
                %v203 = vld [vmem:[%s171 + $0xf0] sm:%s164]
                %204 = vst [vmem:[%s172 + $0x78] sm:%s164] %v203
                %v205 = vld [vmem:[%s171 + $0x100] sm:%s164]
                %206 = vst [vmem:[%s172 + $0x80] sm:%s164] %v205
                %v207 = vld [vmem:[%s171 + $0x110] sm:%s164]
                %208 = vst [vmem:[%s172 + $0x88] sm:%s164] %v207
                %v209 = vld [vmem:[%s171 + $0x120] sm:%s164]
                %210 = vst [vmem:[%s172 + $0x90] sm:%s164] %v209
              $region41: #{tpu_custom_call.1} parent=35 // loop_footer
                %s170 = sadd.s32 1, %s166
              $region42: #{tpu_custom_call.1} parent=35 // loop_footer_branch
                %165 = sbr.rel target = $region38
              $region43: #{tpu_custom_call.1} parent=35 // loop_exit
                _
            $region36: #{tpu_custom_call.1} parent=27 // pred_fallthru
              _
          $region28: #{tpu_custom_call.1} parent=23 // pred_fallthru
            _
          %261 = vnop
        $region24: #{tpu_custom_call.1} parent=19 // pred_fallthru
          _
        // Predicated region
        $region59: #{tpu_custom_call.1} parent=19 // pred_check
          %p262 = pneg %p70
        $region60: #{tpu_custom_call.1} parent=19 // pred_check_branch
          %264 = sbr.rel (%p262) target = $region62
        $region61: #{tpu_custom_call.1} parent=19 // pred_region
          %p265 = scmp.lt.s32.totalorder %s18, 1
          %s266 = scalar_select %p265, %s18, 1
          %s267 = scalar_lea.vmem %s1, %s266
        $region62: #{tpu_custom_call.1} parent=19 // pred_fallthru
          _
      $region20: #{tpu_custom_call.1} parent=5 // pred_fallthru
        _
      %p268 = scmp.le.s32.totalorder 1, %s10
      %p269 = scmp.lt.s32.totalorder %s10, 5
      %p270 = pnand %p268, %p269
      %p271 = pneg %p270
      // Predicated region
      $region63: #{tpu_custom_call.1} parent=5 // pred_check
        _
      $region64: #{tpu_custom_call.1} parent=5 // pred_check_branch
        %273 = sbr.rel (%p270) target = $region66
      $region65: #{tpu_custom_call.1} parent=5 // pred_region
        %s274 = ssub.s32 %s10, 1
        %s275 = sand.u32 %s37, 1
        %s276 = sand.u32 %s37, 1
        %s277 = smul.addr %s276, 152
        %s278 = scalar_lea.vmem [#allocation4], %s277
        // Predicated region
        $region67: #{tpu_custom_call.1} parent=65 // pred_check
          %p279 = pneg %p50
        $region68: #{tpu_custom_call.1} parent=65 // pred_check_branch
          %281 = sbr.rel (%p279) target = $region70
        $region69: #{tpu_custom_call.1} parent=65 // pred_region
          _
        $region70: #{tpu_custom_call.1} parent=65 // pred_fallthru
          _
        %s282 = sand.u32 %s37, 1
        %s283 = sand.u32 %s37, 1
        %s284 = smul.addr %s283, 152
        %s285 = scalar_lea.vmem [#allocation4], %s284
        %p286 = pneg %p50
        %p287 = pneg %p47
        %p288 = scmp.lt.s32.totalorder %s20, 1
        %s289 = scalar_select %p288, %s20, 1
        %s290 = scalar_lea.vmem %s1, %s289
        %p291 = pneg %p76
        %p292 = pneg %p73
        %p293 = pneg %p97
        %p294 = pneg %p94
        %p295 = pneg %p123
        %p296 = pneg %p120
        %s297 = smul.u32 19, %s19
        %p298 = scmp.lt.s32.totalorder %s297, 37
        %s299 = scalar_select %p298, %s297, 37
        %s300 = smul.addr %s299, 8
        %s301 = scalar_lea.vmem %s3, %s300
        %s302 = smul.u32 19, %s19
        %p303 = scmp.lt.s32.totalorder %s20, 1
        %s304 = scalar_select %p303, %s20, 1
        %s305 = scalar_lea.vmem %s1, %s304
        %s306 = smul.u32 19, %s19
        %p307 = scmp.lt.s32.totalorder %s306, 37
        %s308 = scalar_select %p307, %s306, 37
        %s309 = smul.addr %s308, 8
        %s310 = scalar_lea.vmem %s3, %s309
        %s311 = smul.u32 19, %s19
        %p312 = scmp.eq.s32.totalorder %s20, 0
        // Predicated region
        $region71: #{tpu_custom_call.1} parent=65 // pred_check
          %p313 = pneg %p312
        $region72: #{tpu_custom_call.1} parent=65 // pred_check_branch
          %315 = sbr.rel (%p313) target = $region74
        $region73: #{tpu_custom_call.1} parent=65 // pred_region
          %316 = vst [vmem:[#allocation2] sm:$0xff] 0.0
          %317 = vst [vmem:[#allocation2 + $0x8] sm:$0xff] 0.0
          %318 = vst [vmem:[#allocation2 + $0x10] sm:$0xff] 0.0
          %319 = vst [vmem:[#allocation2 + $0x18] sm:$0xff] 0.0
          %320 = vst [vmem:[#allocation2 + $0x20] sm:$0xff] 0.0
          %321 = vst [vmem:[#allocation2 + $0x28] sm:$0xff] 0.0
          %322 = vst [vmem:[#allocation2 + $0x30] sm:$0xff] 0.0
          %323 = vst [vmem:[#allocation2 + $0x38] sm:$0xff] 0.0
          %324 = vst [vmem:[#allocation2 + $0x40] sm:$0xff] 0.0
          %325 = vst [vmem:[#allocation2 + $0x48] sm:$0xff] 0.0
          %326 = vst [vmem:[#allocation2 + $0x50] sm:$0xff] 0.0
          %327 = vst [vmem:[#allocation2 + $0x58] sm:$0xff] 0.0
          %328 = vst [vmem:[#allocation2 + $0x60] sm:$0xff] 0.0
          %329 = vst [vmem:[#allocation2 + $0x68] sm:$0xff] 0.0
          %330 = vst [vmem:[#allocation2 + $0x70] sm:$0xff] 0.0
          %331 = vst [vmem:[#allocation2 + $0x78] sm:$0xff] 0.0
          %332 = vst [vmem:[#allocation2 + $0x80] sm:$0xff] 0.0
          %333 = vst [vmem:[#allocation2 + $0x88] sm:$0xff] 0.0
          %334 = vst [vmem:[#allocation2 + $0x90] sm:$0xff] 0.0
        $region74: #{tpu_custom_call.1} parent=65 // pred_fallthru
          _
        %s335 = smul.u32 %s20, 128
        %s336 = ssub.s32 200, %s335
        %v337 = vlaneseq
        %v338 = vand.u32 %v337, 127
        %v339 = vld [vmem:[%s278] sm:$0xff]
        %v340 = vld [vmem:[%s278 + $0x8] sm:$0xff]
        %v341 = vld [vmem:[%s278 + $0x10] sm:$0xff]
        %v342 = vld [vmem:[%s278 + $0x18] sm:$0xff]
        %v343 = vld [vmem:[%s278 + $0x20] sm:$0xff]
        %v344 = vld [vmem:[%s278 + $0x28] sm:$0xff]
        %v345 = vld [vmem:[%s278 + $0x30] sm:$0xff]
        %v346 = vld [vmem:[%s278 + $0x38] sm:$0xff]
        %v347 = vld [vmem:[%s278 + $0x40] sm:$0xff]
        %v348 = vld [vmem:[%s278 + $0x48] sm:$0xff]
        %v349 = vld [vmem:[%s278 + $0x50] sm:$0xff]
        %v350 = vld [vmem:[%s278 + $0x58] sm:$0xff]
        %v351 = vld [vmem:[%s278 + $0x60] sm:$0xff]
        %v352 = vld [vmem:[%s278 + $0x68] sm:$0xff]
        %v353 = vld [vmem:[%s278 + $0x70] sm:$0xff]
        %v354 = vld [vmem:[%s278 + $0x78] sm:$0xff]
        %v355 = vld [vmem:[%s278 + $0x80] sm:$0xff]
        %v356 = vld [vmem:[%s278 + $0x88] sm:$0xff]
        %v357 = vld [vmem:[%s278 + $0x90] sm:$0xff]
        %v358 = vld [vmem:[%s305] sm:$0x1]
        %v359 = vstv %s336
        %vm360 = vcmp.lt.s32.totalorder %v338, %v359
        %v361 = vsel %vm360, %v339, 0.0
        %v362 = vsel %vm360, %v340, 0.0
        %v363 = vsel %vm360, %v341, 0.0
        %v364 = vsel %vm360, %v342, 0.0
        %v365 = vsel %vm360, %v343, 0.0
        %v366 = vsel %vm360, %v344, 0.0
        %v367 = vsel %vm360, %v345, 0.0
        %v368 = vsel %vm360, %v346, 0.0
        %v369 = vsel %vm360, %v347, 0.0
        %v370 = vsel %vm360, %v348, 0.0
        %v371 = vsel %vm360, %v349, 0.0
        %v372 = vsel %vm360, %v350, 0.0
        %v373 = vsel %vm360, %v351, 0.0
        %v374 = vsel %vm360, %v352, 0.0
        %v375 = vsel %vm360, %v353, 0.0
        %v376 = vsel %vm360, %v354, 0.0
        %v377 = vsel %vm360, %v355, 0.0
        %v378 = vsel %vm360, %v356, 0.0
        %v379 = vsel %vm360, %v357, 0.0
        %v380 = vld [vmem:[#allocation2] sm:$0xff]
        %v381 = vld [vmem:[#allocation2 + $0x8] sm:$0xff]
        %v382 = vld [vmem:[#allocation2 + $0x10] sm:$0xff]
        %v383 = vld [vmem:[#allocation2 + $0x18] sm:$0xff]
        %v384 = vld [vmem:[#allocation2 + $0x20] sm:$0xff]
        %v385 = vld [vmem:[#allocation2 + $0x28] sm:$0xff]
        %v386 = vld [vmem:[#allocation2 + $0x30] sm:$0xff]
        %v387 = vld [vmem:[#allocation2 + $0x38] sm:$0xff]
        %v388 = vld [vmem:[#allocation2 + $0x40] sm:$0xff]
        %v389 = vld [vmem:[#allocation2 + $0x48] sm:$0xff]
        %v390 = vld [vmem:[#allocation2 + $0x50] sm:$0xff]
        %v391 = vld [vmem:[#allocation2 + $0x58] sm:$0xff]
        %v392 = vld [vmem:[#allocation2 + $0x60] sm:$0xff]
        %v393 = vld [vmem:[#allocation2 + $0x68] sm:$0xff]
        %v394 = vld [vmem:[#allocation2 + $0x70] sm:$0xff]
        %v395 = vld [vmem:[#allocation2 + $0x78] sm:$0xff]
        %v396 = vld [vmem:[#allocation2 + $0x80] sm:$0xff]
        %v397 = vld [vmem:[#allocation2 + $0x88] sm:$0xff]
        %v398 = vld [vmem:[#allocation2 + $0x90] sm:$0xff]
        %v400 = vlaneseq
        %v401 = vshrl.u32 %v400, 7
        %v402 = vsub.s32 0, %v401
        %v403 = vrot.slane %v358, %v402
        %v405 = vmul.f32 %v361, %v403
        %v406 = vmul.f32 %v362, %v403
        %v407 = vmul.f32 %v363, %v403
        %v408 = vmul.f32 %v364, %v403
        %v409 = vmul.f32 %v365, %v403
        %v410 = vmul.f32 %v366, %v403
        %v411 = vmul.f32 %v367, %v403
        %v412 = vmul.f32 %v368, %v403
        %v413 = vmul.f32 %v369, %v403
        %v414 = vmul.f32 %v370, %v403
        %v415 = vmul.f32 %v371, %v403
        %v416 = vmul.f32 %v372, %v403
        %v417 = vmul.f32 %v373, %v403
        %v418 = vmul.f32 %v374, %v403
        %v419 = vmul.f32 %v375, %v403
        %v420 = vmul.f32 %v376, %v403
        %v421 = vmul.f32 %v377, %v403
        %v422 = vmul.f32 %v378, %v403
        %v423 = vmul.f32 %v379, %v403
        %v424 = vadd.f32 %v380, %v405
        %v425 = vadd.f32 %v381, %v406
        %v426 = vadd.f32 %v382, %v407
        %v427 = vadd.f32 %v383, %v408
        %v428 = vadd.f32 %v384, %v409
        %v429 = vadd.f32 %v385, %v410
        %v430 = vadd.f32 %v386, %v411
        %v431 = vadd.f32 %v387, %v412
        %v432 = vadd.f32 %v388, %v413
        %v433 = vadd.f32 %v389, %v414
        %v434 = vadd.f32 %v390, %v415
        %v435 = vadd.f32 %v391, %v416
        %v436 = vadd.f32 %v392, %v417
        %v437 = vadd.f32 %v393, %v418
        %v438 = vadd.f32 %v394, %v419
        %v439 = vadd.f32 %v395, %v420
        %v440 = vadd.f32 %v396, %v421
        %v441 = vadd.f32 %v397, %v422
        %v442 = vadd.f32 %v398, %v423
        %443 = vst [vmem:[#allocation2] sm:$0xff] %v424
        %444 = vst [vmem:[#allocation2 + $0x8] sm:$0xff] %v425
        %445 = vst [vmem:[#allocation2 + $0x10] sm:$0xff] %v426
        %446 = vst [vmem:[#allocation2 + $0x18] sm:$0xff] %v427
        %447 = vst [vmem:[#allocation2 + $0x20] sm:$0xff] %v428
        %448 = vst [vmem:[#allocation2 + $0x28] sm:$0xff] %v429
        %449 = vst [vmem:[#allocation2 + $0x30] sm:$0xff] %v430
        %450 = vst [vmem:[#allocation2 + $0x38] sm:$0xff] %v431
        %451 = vst [vmem:[#allocation2 + $0x40] sm:$0xff] %v432
        %452 = vst [vmem:[#allocation2 + $0x48] sm:$0xff] %v433
        %453 = vst [vmem:[#allocation2 + $0x50] sm:$0xff] %v434
        %454 = vst [vmem:[#allocation2 + $0x58] sm:$0xff] %v435
        %455 = vst [vmem:[#allocation2 + $0x60] sm:$0xff] %v436
        %456 = vst [vmem:[#allocation2 + $0x68] sm:$0xff] %v437
        %457 = vst [vmem:[#allocation2 + $0x70] sm:$0xff] %v438
        %458 = vst [vmem:[#allocation2 + $0x78] sm:$0xff] %v439
        %459 = vst [vmem:[#allocation2 + $0x80] sm:$0xff] %v440
        %460 = vst [vmem:[#allocation2 + $0x88] sm:$0xff] %v441
        %461 = vst [vmem:[#allocation2 + $0x90] sm:$0xff] %v442
        %p462 = scmp.eq.s32.totalorder %s20, 1
        // Predicated region
        $region75: #{tpu_custom_call.1} parent=65 // pred_check
          %p463 = pneg %p462
        $region76: #{tpu_custom_call.1} parent=65 // pred_check_branch
          %465 = sbr.rel (%p463) target = $region78
        $region77: #{tpu_custom_call.1} parent=65 // pred_region
          %v466 = vld [vmem:[#allocation2] sm:$0xff]
          %v467 = vld [vmem:[#allocation2 + $0x8] sm:$0xff]
          %v468 = vld [vmem:[#allocation2 + $0x10] sm:$0xff]
          %v469 = vld [vmem:[#allocation2 + $0x18] sm:$0xff]
          %v470 = vld [vmem:[#allocation2 + $0x20] sm:$0xff]
          %v471 = vld [vmem:[#allocation2 + $0x28] sm:$0xff]
          %v472 = vld [vmem:[#allocation2 + $0x30] sm:$0xff]
          %v473 = vld [vmem:[#allocation2 + $0x38] sm:$0xff]
          %v474 = vld [vmem:[#allocation2 + $0x40] sm:$0xff]
          %v475 = vld [vmem:[#allocation2 + $0x48] sm:$0xff]
          %v476 = vld [vmem:[#allocation2 + $0x50] sm:$0xff]
          %v477 = vld [vmem:[#allocation2 + $0x58] sm:$0xff]
          %v478 = vld [vmem:[#allocation2 + $0x60] sm:$0xff]
          %v479 = vld [vmem:[#allocation2 + $0x68] sm:$0xff]
          %v480 = vld [vmem:[#allocation2 + $0x70] sm:$0xff]
          %v481 = vld [vmem:[#allocation2 + $0x78] sm:$0xff]
          %v482 = vld [vmem:[#allocation2 + $0x80] sm:$0xff]
          %v483 = vld [vmem:[#allocation2 + $0x88] sm:$0xff]
          %v484 = vld [vmem:[#allocation2 + $0x90] sm:$0xff]
          %485 = vadd.xlane.f32.xlu0 %v466
          %v486 = vpop.xlane.xlu0 %485
          %487 = vadd.xlane.f32.xlu0 %v467
          %v488 = vpop.xlane.xlu0 %487
          %489 = vadd.xlane.f32.xlu0 %v468
          %v490 = vpop.xlane.xlu0 %489
          %491 = vadd.xlane.f32.xlu0 %v469
          %v492 = vpop.xlane.xlu0 %491
          %493 = vadd.xlane.f32.xlu0 %v470
          %v494 = vpop.xlane.xlu0 %493
          %495 = vadd.xlane.f32.xlu0 %v471
          %v496 = vpop.xlane.xlu0 %495
          %497 = vadd.xlane.f32.xlu0 %v472
          %v498 = vpop.xlane.xlu0 %497
          %499 = vadd.xlane.f32.xlu0 %v473
          %v500 = vpop.xlane.xlu0 %499
          %501 = vadd.xlane.f32.xlu0 %v474
          %v502 = vpop.xlane.xlu0 %501
          %503 = vadd.xlane.f32.xlu0 %v475
          %v504 = vpop.xlane.xlu0 %503
          %505 = vadd.xlane.f32.xlu0 %v476
          %v506 = vpop.xlane.xlu0 %505
          %507 = vadd.xlane.f32.xlu0 %v477
          %v508 = vpop.xlane.xlu0 %507
          %509 = vadd.xlane.f32.xlu0 %v478
          %v510 = vpop.xlane.xlu0 %509
          %511 = vadd.xlane.f32.xlu0 %v479
          %v512 = vpop.xlane.xlu0 %511
          %513 = vadd.xlane.f32.xlu0 %v480
          %v514 = vpop.xlane.xlu0 %513
          %515 = vadd.xlane.f32.xlu0 %v481
          %v516 = vpop.xlane.xlu0 %515
          %517 = vadd.xlane.f32.xlu0 %v482
          %v518 = vpop.xlane.xlu0 %517
          %519 = vadd.xlane.f32.xlu0 %v483
          %v520 = vpop.xlane.xlu0 %519
          %521 = vadd.xlane.f32.xlu0 %v484
          %v522 = vpop.xlane.xlu0 %521
          %s523 = sld [smem:[#allocation3]]
          %v524 = vstv %s523
          %v525 = vadd.f32 %v486, %v524
          %v526 = vadd.f32 %v488, %v524
          %v527 = vadd.f32 %v490, %v524
          %v528 = vadd.f32 %v492, %v524
          %v529 = vadd.f32 %v494, %v524
          %v530 = vadd.f32 %v496, %v524
          %v531 = vadd.f32 %v498, %v524
          %v532 = vadd.f32 %v500, %v524
          %v533 = vadd.f32 %v502, %v524
          %v534 = vadd.f32 %v504, %v524
          %v535 = vadd.f32 %v506, %v524
          %v536 = vadd.f32 %v508, %v524
          %v537 = vadd.f32 %v510, %v524
          %v538 = vadd.f32 %v512, %v524
          %v539 = vadd.f32 %v514, %v524
          %v540 = vadd.f32 %v516, %v524
          %v541 = vadd.f32 %v518, %v524
          %v542 = vadd.f32 %v520, %v524
          %v543 = vadd.f32 %v522, %v524
          %v544 = vxor.u32 %v525, 2147483648
          %v545 = vxor.u32 %v526, 2147483648
          %v546 = vxor.u32 %v527, 2147483648
          %v547 = vxor.u32 %v528, 2147483648
          %v548 = vxor.u32 %v529, 2147483648
          %v549 = vxor.u32 %v530, 2147483648
          %v550 = vxor.u32 %v531, 2147483648
          %v551 = vxor.u32 %v532, 2147483648
          %v552 = vxor.u32 %v533, 2147483648
          %v553 = vxor.u32 %v534, 2147483648
          %v554 = vxor.u32 %v535, 2147483648
          %v555 = vxor.u32 %v536, 2147483648
          %v556 = vxor.u32 %v537, 2147483648
          %v557 = vxor.u32 %v538, 2147483648
          %v558 = vxor.u32 %v539, 2147483648
          %v559 = vxor.u32 %v540, 2147483648
          %v560 = vxor.u32 %v541, 2147483648
          %v561 = vxor.u32 %v542, 2147483648
          %v562 = vxor.u32 %v543, 2147483648
          %v563 = vmul.f32 %v544, 1.442695
          %v564 = vpow.pop %v563
          %v565 = vmul.f32 %v545, 1.442695
          %v566 = vpow.pop %v565
          %v567 = vmul.f32 %v546, 1.442695
          %v568 = vpow.pop %v567
          %v569 = vmul.f32 %v547, 1.442695
          %v570 = vpow.pop %v569
          %v571 = vmul.f32 %v548, 1.442695
          %v572 = vpow.pop %v571
          %v573 = vmul.f32 %v549, 1.442695
          %v574 = vpow.pop %v573
          %v575 = vmul.f32 %v550, 1.442695
          %v576 = vpow.pop %v575
          %v577 = vmul.f32 %v551, 1.442695
          %v578 = vpow.pop %v577
          %v579 = vmul.f32 %v552, 1.442695
          %v580 = vpow.pop %v579
          %v581 = vmul.f32 %v553, 1.442695
          %v582 = vpow.pop %v581
          %v583 = vmul.f32 %v554, 1.442695
          %v584 = vpow.pop %v583
          %v585 = vmul.f32 %v555, 1.442695
          %v586 = vpow.pop %v585
          %v587 = vmul.f32 %v556, 1.442695
          %v588 = vpow.pop %v587
          %v589 = vmul.f32 %v557, 1.442695
          %v590 = vpow.pop %v589
          %v591 = vmul.f32 %v558, 1.442695
          %v592 = vpow.pop %v591
          %v593 = vmul.f32 %v559, 1.442695
          %v594 = vpow.pop %v593
          %v595 = vmul.f32 %v560, 1.442695
          %v596 = vpow.pop %v595
          %v597 = vmul.f32 %v561, 1.442695
          %v598 = vpow.pop %v597
          %v599 = vmul.f32 %v562, 1.442695
          %v600 = vpow.pop %v599
          %v601 = vadd.f32 %v564, 1.0
          %v602 = vadd.f32 %v566, 1.0
          %v603 = vadd.f32 %v568, 1.0
          %v604 = vadd.f32 %v570, 1.0
          %v605 = vadd.f32 %v572, 1.0
          %v606 = vadd.f32 %v574, 1.0
          %v607 = vadd.f32 %v576, 1.0
          %v608 = vadd.f32 %v578, 1.0
          %v609 = vadd.f32 %v580, 1.0
          %v610 = vadd.f32 %v582, 1.0
          %v611 = vadd.f32 %v584, 1.0
          %v612 = vadd.f32 %v586, 1.0
          %v613 = vadd.f32 %v588, 1.0
          %v614 = vadd.f32 %v590, 1.0
          %v615 = vadd.f32 %v592, 1.0
          %v616 = vadd.f32 %v594, 1.0
          %v617 = vadd.f32 %v596, 1.0
          %v618 = vadd.f32 %v598, 1.0
          %v619 = vadd.f32 %v600, 1.0
          %v620 = vrcp.pop %v601
          %v621 = vmul.f32 1.0, %v620
          %v622 = vrcp.pop %v602
          %v623 = vmul.f32 1.0, %v622
          %v624 = vrcp.pop %v603
          %v625 = vmul.f32 1.0, %v624
          %v626 = vrcp.pop %v604
          %v627 = vmul.f32 1.0, %v626
          %v628 = vrcp.pop %v605
          %v629 = vmul.f32 1.0, %v628
          %v630 = vrcp.pop %v606
          %v631 = vmul.f32 1.0, %v630
          %v632 = vrcp.pop %v607
          %v633 = vmul.f32 1.0, %v632
          %v634 = vrcp.pop %v608
          %v635 = vmul.f32 1.0, %v634
          %v636 = vrcp.pop %v609
          %v637 = vmul.f32 1.0, %v636
          %v638 = vrcp.pop %v610
          %v639 = vmul.f32 1.0, %v638
          %v640 = vrcp.pop %v611
          %v641 = vmul.f32 1.0, %v640
          %v642 = vrcp.pop %v612
          %v643 = vmul.f32 1.0, %v642
          %v644 = vrcp.pop %v613
          %v645 = vmul.f32 1.0, %v644
          %v646 = vrcp.pop %v614
          %v647 = vmul.f32 1.0, %v646
          %v648 = vrcp.pop %v615
          %v649 = vmul.f32 1.0, %v648
          %v650 = vrcp.pop %v616
          %v651 = vmul.f32 1.0, %v650
          %v652 = vrcp.pop %v617
          %v653 = vmul.f32 1.0, %v652
          %v654 = vrcp.pop %v618
          %v655 = vmul.f32 1.0, %v654
          %v656 = vrcp.pop %v619
          %v657 = vmul.f32 1.0, %v656
          %vm658 = vcmask 7168
          %659 = vst.msk [vmem:[%s310] sm:$0xff] %vm658, %v621
          %660 = vst.msk [vmem:[%s310 + $0x8] sm:$0xff] %vm658, %v623
          %661 = vst.msk [vmem:[%s310 + $0x10] sm:$0xff] %vm658, %v625
          %662 = vst.msk [vmem:[%s310 + $0x18] sm:$0xff] %vm658, %v627
          %663 = vst.msk [vmem:[%s310 + $0x20] sm:$0xff] %vm658, %v629
          %664 = vst.msk [vmem:[%s310 + $0x28] sm:$0xff] %vm658, %v631
          %665 = vst.msk [vmem:[%s310 + $0x30] sm:$0xff] %vm658, %v633
          %666 = vst.msk [vmem:[%s310 + $0x38] sm:$0xff] %vm658, %v635
          %667 = vst.msk [vmem:[%s310 + $0x40] sm:$0xff] %vm658, %v637
          %668 = vst.msk [vmem:[%s310 + $0x48] sm:$0xff] %vm658, %v639
          %669 = vst.msk [vmem:[%s310 + $0x50] sm:$0xff] %vm658, %v641
          %670 = vst.msk [vmem:[%s310 + $0x58] sm:$0xff] %vm658, %v643
          %671 = vst.msk [vmem:[%s310 + $0x60] sm:$0xff] %vm658, %v645
          %672 = vst.msk [vmem:[%s310 + $0x68] sm:$0xff] %vm658, %v647
          %673 = vst.msk [vmem:[%s310 + $0x70] sm:$0xff] %vm658, %v649
          %674 = vst.msk [vmem:[%s310 + $0x78] sm:$0xff] %vm658, %v651
          %675 = vst.msk [vmem:[%s310 + $0x80] sm:$0xff] %vm658, %v653
          %676 = vst.msk [vmem:[%s310 + $0x88] sm:$0xff] %vm658, %v655
          %677 = vst.msk [vmem:[%s310 + $0x90] sm:$0xff] %vm658, %v657
        $region78: #{tpu_custom_call.1} parent=65 // pred_fallthru
          _
        %s678 = smul.u32 19, %s19
        %p679 = scmp.lt.s32.totalorder %s678, 37
        %s680 = scalar_select %p679, %s678, 37
        %s681 = smul.addr %s680, 8
        %s682 = scalar_lea.vmem %s3, %s681
        // Predicated region
        $region79: #{tpu_custom_call.1} parent=65 // pred_check
          %p683 = pneg %p120
        $region80: #{tpu_custom_call.1} parent=65 // pred_check_branch
          %685 = sbr.rel (%p683) target = $region82
        $region81: #{tpu_custom_call.1} parent=65 // pred_region
          %s686 = smul.u32 19, %s19
        $region82: #{tpu_custom_call.1} parent=65 // pred_fallthru
          _
      $region66: #{tpu_custom_call.1} parent=5 // pred_fallthru
        _
      %p687 = scmp.le.s32.totalorder 2, %s10
      // Predicated region
      $region83: #{tpu_custom_call.1} parent=5 // pred_check
        %p688 = pneg %p687
      $region84: #{tpu_custom_call.1} parent=5 // pred_check_branch
        %690 = sbr.rel (%p688) target = $region86
      $region85: #{tpu_custom_call.1} parent=5 // pred_region
        %s691 = ssub.s32 %s10, 2
        // Predicated region
        $region87: #{tpu_custom_call.1} parent=85 // pred_check
          %p692 = pneg %p126
        $region88: #{tpu_custom_call.1} parent=85 // pred_check_branch
          %694 = sbr.rel (%p692) target = $region90
        $region89: #{tpu_custom_call.1} parent=85 // pred_region
          %s695 = smul.u32 19, %s21
          %p696 = scmp.lt.s32.totalorder %s695, 37
          %s697 = scalar_select %p696, %s695, 37
          %s698 = smul.addr %s697, 8
          %s699 = scalar_lea.vmem %s3, %s698
        $region90: #{tpu_custom_call.1} parent=85 // pred_fallthru
          _
      $region86: #{tpu_custom_call.1} parent=5 // pred_fallthru
        _
    $region6: #{tpu_custom_call.1} parent=1 // loop_footer
      %s14 = sadd.s32 1, %s10
    $region7: #{tpu_custom_call.1} parent=1 // loop_footer_branch
      %9 = sbr.rel target = $region3
    $region8: #{tpu_custom_call.1} parent=1 // loop_exit
      _

</llo_original>
